<compile_context>
chip_gen: v7x
topology: tpu7x:2x2x1
jax: 0.10.0
libtpu: 0.0.40
codegen_flags: <defaults>
</compile_context>

<pallas_src>
import math

import jax
import jax.numpy as jnp
from jax.experimental import pallas as pl
from jax.experimental.pallas import tpu as pltpu

_LANES = 128
_SUBLANES = 8
_LOG_CLAMP = math.log(1e-8)   # probs.clamp(min=1e-8).log() == max(log_probs, log(1e-8))
_NEG_BIG = -1e30              # finite "-inf" baked into padded output-bias lanes


def _round_up(x, m):
    return (x + m - 1) // m * m


def _vmem_capacity_bytes():
    """Per-TensorCore VMEM capacity; conservative 64 MiB (v7x) if unknown."""
    try:
        info = pltpu.get_tpu_info()
        cap = int(getattr(info, "vmem_capacity_bytes", 0))
        if cap > 0:
            return cap
    except Exception:
        pass
    return 64 << 20


# ----------------------------------------------------------------- kernel math
def _logits_1hidden(x_ref, w1_ref, b1_ref, w2_ref, b2_ref):
    """relu(x @ W1 + b1) @ W2 + b2  (bf16 MXU inputs, f32 accumulation)."""
    x = x_ref[...].astype(w1_ref.dtype)
    h = jnp.dot(x, w1_ref[...], preferred_element_type=jnp.float32) + b1_ref[...]
    h = jnp.maximum(h, 0.0)
    return jnp.dot(h.astype(w2_ref.dtype), w2_ref[...],
                   preferred_element_type=jnp.float32) + b2_ref[...]


def _logits_0hidden(x_ref, w1_ref, b1_ref):
    x = x_ref[...].astype(w1_ref.dtype)
    return jnp.dot(x, w1_ref[...], preferred_element_type=jnp.float32) + b1_ref[...]


def _softmax(logits):
    """Row softmax. Padded columns carry -1e30 from the bias -> exp() == 0."""
    m = jnp.max(logits, axis=1, keepdims=True)
    e = jnp.exp(logits - m)
    s = jnp.sum(e, axis=1, keepdims=True)
    probs = e * (1.0 / s)              # exact reciprocal: one divide per row
    lse = m + jnp.log(s)
    return probs, lse


def _row_neg_xent(logits, lse, t):
    """Per-row -sum_j t * clamp(log_softmax(logits), log(1e-8)).  Padded
    columns/rows have t == 0 and contribute exactly 0."""
    log_probs = jnp.maximum(logits - lse, _LOG_CLAMP)
    return -jnp.sum(t * log_probs, axis=1, keepdims=True)


# ------------------------------------------------------------------- kernels
def _mlp1_infer_kernel(x_ref, w1_ref, b1_ref, w2_ref, b2_ref,
                       probs_ref, logits_ref):
    logits = _logits_1hidden(x_ref, w1_ref, b1_ref, w2_ref, b2_ref)
    logits_ref[...] = logits
    probs, _ = _softmax(logits)
    probs_ref[...] = probs


def _mlp0_infer_kernel(x_ref, w1_ref, b1_ref, probs_ref, logits_ref):
    logits = _logits_0hidden(x_ref, w1_ref, b1_ref)
    logits_ref[...] = logits
    probs, _ = _softmax(logits)
    probs_ref[...] = probs


def _mlp1_train_kernel(x_ref, w1_ref, b1_ref, w2_ref, b2_ref, t_ref,
                       probs_ref, logits_ref, rowloss_ref):
    logits = _logits_1hidden(x_ref, w1_ref, b1_ref, w2_ref, b2_ref)
    logits_ref[...] = logits
    probs, lse = _softmax(logits)
    probs_ref[...] = probs
    rowloss_ref[...] = _row_neg_xent(logits, lse, t_ref[...])


def _mlp0_train_kernel(x_ref, w1_ref, b1_ref, t_ref,
                       probs_ref, logits_ref, rowloss_ref):
    logits = _logits_0hidden(x_ref, w1_ref, b1_ref)
    logits_ref[...] = logits
    probs, lse = _softmax(logits)
    probs_ref[...] = probs
    rowloss_ref[...] = _row_neg_xent(logits, lse, t_ref[...])


# ------------------------------------------------------------------- wrapper
class ConfigurableLinearNNPallas:
    """JAX/Pallas equivalent of the PyTorch ConfigurableLinearNN forward pass."""

    def __init__(self, input_dim, output_dim, model_type="mlp",
                 n_layers=1, hidden_dim=256, key=None):
        if n_layers not in {0, 1}:
            raise ValueError("n_layers must be 0, or 1")
        self.model_type = model_type
        self.input_dim = input_dim
        self.output_dim = output_dim
        self.n_layers = n_layers
        self.hidden_dim = hidden_dim

        self._out_pad = _round_up(output_dim, _LANES)
        self._hid_pad = _round_up(hidden_dim, _LANES)

        if key is None:
            key = jax.random.PRNGKey(0)

        def linear_params(k, fan_in, fan_out, fan_in_pad, fan_out_pad, mask_pad_bias):
            # nn.Linear default init: U(-1/sqrt(fan_in), 1/sqrt(fan_in)).
            kw, kb = jax.random.split(k)
            bound = 1.0 / math.sqrt(fan_in)
            w = jax.random.uniform(kw, (fan_in, fan_out), jnp.float32, -bound, bound)
            b = jax.random.uniform(kb, (1, fan_out), jnp.float32, -bound, bound)
            # Zero-pad weights to lane-aligned shapes (padded lanes contribute 0).
            w = jnp.pad(w, ((0, fan_in_pad - fan_in), (0, fan_out_pad - fan_out)))
            # For the *output* layer, bake the column mask into the padded bias
            # lanes: softmax then sees -1e30 there and produces exact zeros,
            # with no per-tile iota/where in the kernel.
            pad_val = _NEG_BIG if mask_pad_bias else 0.0
            b = jnp.pad(b, ((0, 0), (0, fan_out_pad - fan_out)),
                        constant_values=pad_val)
            return w.astype(jnp.bfloat16), b   # bf16 weights, f32 biases

        if n_layers == 0:
            self.w1, self.b1 = linear_params(key, input_dim, output_dim,
                                             input_dim, self._out_pad, True)
            self.w2 = self.b2 = None
        else:
            k1, k2 = jax.random.split(key)
            self.w1, self.b1 = linear_params(k1, input_dim, hidden_dim,
                                             input_dim, self._hid_pad, False)
            self.w2, self.b2 = linear_params(k2, hidden_dim, output_dim,
                                             self._hid_pad, self._out_pad, True)

    def __call__(self, x, targets=None):
        batch = x.shape[0]
        have_targets = targets is not None
        out_pad = self._out_pad

        if self.n_layers == 1:
            weight_args = (self.w1, self.b1, self.w2, self.b2)
            matmul_flops_per_row = 2 * (self.input_dim * self._hid_pad
                                        + self._hid_pad * out_pad)
        else:
            weight_args = (self.w1, self.b1)
            matmul_flops_per_row = 2 * self.input_dim * out_pad
        weight_bytes = sum(int(a.nbytes) for a in weight_args)
        # TODO(synk): if weight_bytes ever approaches the per-generation VMEM
        # budget (v7x: 64 MiB), add a K-axis grid dimension with an f32
        # accumulator instead of keeping all weights VMEM-resident.

        # --- generation-aware VMEM budget & batch-tile selection -------------
        cap = _vmem_capacity_bytes()
        budget = cap * 3 // 4                      # headroom under physical VMEM
        tb_max = 1024 if cap >= (100 << 20) else 512   # v5e/v6e vs v7x
        tb = min(tb_max, _round_up(batch, _SUBLANES))

        def tile_bytes(rows):
            b = rows * self.input_dim * 2              # x tile (bf16)
            b += 2 * rows * out_pad * 4                # probs + logits (f32)
            if have_targets:
                b += rows * out_pad * 4 + rows * 4     # targets + per-row loss
            return b

        while tb > _SUBLANES and (weight_bytes + 2 * tile_bytes(tb)
                                  + (4 << 20)) > budget:
            tb = max(_SUBLANES, _round_up(tb // 2, _SUBLANES))

        bp = _round_up(batch, tb)
        grid = (bp // tb,)

        # --- inputs -----------------------------------------------------------
        x = x.astype(jnp.bfloat16)                 # halve activation DMA bytes
        if bp != batch:
            x = jnp.pad(x, ((0, bp - batch), (0, 0)))

        def row_spec(d):
            return pl.BlockSpec((tb, d), lambda i: (i, 0))

        probs_shape = jax.ShapeDtypeStruct((bp, out_pad), jnp.float32)
        # TODO(synk): on v5e (single vst slot) consider bf16 logits storage if
        # the caller tolerates it; kept f32 here for parity with the module.
        logits_shape = jax.ShapeDtypeStruct((bp, out_pad), jnp.float32)

        if have_targets:
            targets = targets.astype(jnp.float32)
            t = jnp.pad(targets, ((0, bp - batch), (0, out_pad - self.output_dim)))
            kernel = _mlp1_train_kernel if self.n_layers == 1 else _mlp0_train_kernel
            args = (x,) + weight_args + (t,)
            extra_in_specs = [row_spec(out_pad)]
            out_shape = (probs_shape, logits_shape,
                         jax.ShapeDtypeStruct((bp, 1), jnp.float32))
            out_specs = (row_spec(out_pad), row_spec(out_pad), row_spec(1))
            transcendentals = 2 * bp * out_pad + 3 * bp
            bytes_accessed = (int(x.nbytes) + int(t.nbytes) + weight_bytes
                              + 2 * bp * out_pad * 4 + bp * 4)
        else:
            kernel = _mlp1_infer_kernel if self.n_layers == 1 else _mlp0_infer_kernel
            args = (x,) + weight_args
            extra_in_specs = []
            out_shape = (probs_shape, logits_shape)
            out_specs = (row_spec(out_pad), row_spec(out_pad))
            transcendentals = bp * out_pad + 2 * bp
            bytes_accessed = int(x.nbytes) + weight_bytes + 2 * bp * out_pad * 4

        vmem_limit = int(min(max(2 * weight_bytes + 2 * tile_bytes(tb) + (8 << 20),
                                 32 << 20), budget))

        def build(single_buffer_weights):
            if single_buffer_weights:
                def const_spec(a):    # resident weights: nothing to pipeline
                    return pl.BlockSpec(a.shape, lambda i: (0, 0),
                                        pipeline_mode=pl.Buffered(1))
            else:
                def const_spec(a):
                    return pl.BlockSpec(a.shape, lambda i: (0, 0))
            in_specs = ([row_spec(self.input_dim)]
                        + [const_spec(a) for a in weight_args]
                        + extra_in_specs)
            return pl.pallas_call(
                kernel,
                grid=grid,
                in_specs=in_specs,
                out_specs=out_specs,
                out_shape=out_shape,
                compiler_params=pltpu.CompilerParams(
                    dimension_semantics=("parallel",),
                    vmem_limit_bytes=vmem_limit),
                cost_estimate=pl.CostEstimate(
                    flops=int(bp * matmul_flops_per_row),
                    transcendentals=int(transcendentals),
                    bytes_accessed=int(bytes_accessed)),
            )

        try:
            outs = build(True)(*args)
        except Exception:
            # Fallback for JAX versions without BlockSpec pipeline_mode /
            # pl.Buffered(1); default (double-buffered) weight specs still work.
            outs = build(False)(*args)

        probs = outs[0][:batch, :self.output_dim]
        logits = outs[1][:batch, :self.output_dim]
        loss = None
        if have_targets:
            # KL(t || p) batchmean = [ sum t*log t  +  sum (-t*log_probs) ] / batch
            entropy = jnp.sum(jnp.where(targets > 0.0,
                                        targets * jnp.log(targets), 0.0))
            loss = (entropy + jnp.sum(outs[2])) / batch
        return probs, logits, loss


if __name__ == "__main__":
    key = jax.random.PRNGKey(0)
    k_x, k_t, k_p1, k_p0 = jax.random.split(key, 4)

    batch, input_dim, hidden_dim, output_dim = 8, 16, 32, 8

    x = jax.random.normal(k_x, (batch, input_dim), jnp.float32)
    # targets: valid probability distributions per row (as KLDivLoss expects)
    targets = jax.nn.softmax(
        jax.random.normal(k_t, (batch, output_dim), jnp.float32), axis=1)

    model = ConfigurableLinearNNPallas(input_dim, output_dim, model_type="mlp",
                                       n_layers=1, hidden_dim=hidden_dim, key=k_p1)

    probs, logits, loss = model(x, targets)
    jax.block_until_ready((probs, logits, loss))

    # ---- plain-JAX reference using the same bf16 padded weights ------------
    xb = x.astype(jnp.bfloat16)
    h_ref = jnp.maximum(jnp.dot(xb, model.w1, preferred_element_type=jnp.float32)
                        + model.b1, 0.0)
    logits_full = jnp.dot(h_ref.astype(jnp.bfloat16), model.w2,
                          preferred_element_type=jnp.float32) + model.b2
    logits_ref = logits_full[:, :output_dim]
    probs_ref = jax.nn.softmax(logits_ref, axis=1)
    log_probs_ref = jnp.maximum(jax.nn.log_softmax(logits_ref, axis=1),
                                math.log(1e-8))
    loss_ref = jnp.sum(targets * (jnp.log(targets) - log_probs_ref)) / batch

    assert probs.shape == (batch, output_dim) and logits.shape == (batch, output_dim)
    assert jnp.allclose(logits, logits_ref, atol=1e-3), "logits mismatch"
    assert jnp.allclose(probs, probs_ref, atol=1e-3), "probs mismatch"
    assert jnp.allclose(jnp.sum(probs, axis=1), 1.0, atol=1e-4), "probs not normalized"
    assert jnp.allclose(loss, loss_ref, atol=1e-3), "loss mismatch"

    # inference path (no targets, no KL work)
    probs_i, logits_i, loss_i = model(x)
    jax.block_until_ready((probs_i, logits_i))
    assert loss_i is None
    assert jnp.allclose(logits_i, logits_ref, atol=1e-3)

    # 0-hidden-layer variant
    model0 = ConfigurableLinearNNPallas(input_dim, output_dim, model_type="mlp",
                                        n_layers=0, key=k_p0)
    probs0, logits0, loss0 = model0(x, targets)
    jax.block_until_ready((probs0, logits0, loss0))
    logits0_ref = (jnp.dot(xb, model0.w1, preferred_element_type=jnp.float32)
                   + model0.b1)[:, :output_dim]
    assert jnp.allclose(logits0, logits0_ref, atol=1e-3)
    assert jnp.allclose(probs0, jax.nn.softmax(logits0_ref, axis=1), atol=1e-3)

    print("KERNEL_OK")
</pallas_src>

<mosaic_0001>
module attributes {stable_mosaic.version = 11 : i64} {
  func.func @_mlp1_train_kernel(%arg0: i32, %arg1: memref<8x16xbf16, #tpu.memory_space<vmem>>, %arg2: memref<16x128xbf16, #tpu.memory_space<vmem>>, %arg3: memref<1x128xf32, #tpu.memory_space<vmem>>, %arg4: memref<128x128xbf16, #tpu.memory_space<vmem>>, %arg5: memref<1x128xf32, #tpu.memory_space<vmem>>, %arg6: memref<8x128xf32, #tpu.memory_space<vmem>>, %arg7: memref<8x128xf32, #tpu.memory_space<vmem>>, %arg8: memref<8x128xf32, #tpu.memory_space<vmem>>, %arg9: memref<8x1xf32, #tpu.memory_space<vmem>>) attributes {dimension_semantics = [#tpu.dimension_semantics<parallel>], iteration_bounds = array<i64: 1>, scalar_prefetch = 0 : i64, scratch_operands = 0 : i64, tpu.core_type = #tpu.core_type<tc>, window_params = [{transform_indices = @transform_0, window_bounds = array<i64: 8, 16>}, {pipeline_mode = #tpu.pipeline_mode<synchronous>, transform_indices = @transform_1, window_bounds = array<i64: 16, 128>}, {pipeline_mode = #tpu.pipeline_mode<synchronous>, transform_indices = @transform_2, window_bounds = array<i64: 1, 128>}, {pipeline_mode = #tpu.pipeline_mode<synchronous>, transform_indices = @transform_3, window_bounds = array<i64: 128, 128>}, {pipeline_mode = #tpu.pipeline_mode<synchronous>, transform_indices = @transform_4, window_bounds = array<i64: 1, 128>}, {transform_indices = @transform_5, window_bounds = array<i64: 8, 128>}, {transform_indices = @transform_6, window_bounds = array<i64: 8, 128>}, {transform_indices = @transform_7, window_bounds = array<i64: 8, 128>}, {transform_indices = @transform_8, window_bounds = array<i64: 8, 1>}]} {
    %c0 = arith.constant 0 : index
    %c0_0 = arith.constant 0 : index
    %0 = vector.load %arg1[%c0, %c0_0] : memref<8x16xbf16, #tpu.memory_space<vmem>>, vector<8x16xbf16>
    %c0_1 = arith.constant 0 : index
    %c0_2 = arith.constant 0 : index
    %1 = vector.load %arg2[%c0_1, %c0_2] : memref<16x128xbf16, #tpu.memory_space<vmem>>, vector<16x128xbf16>
    %cst = arith.constant dense<0.000000e+00> : vector<8x128xf32>
    %2 = tpu.matmul %0, %1, %cst {dimension_numbers = #tpu.dot_dimension_numbers<[1], [0], [0], [1], [0, 0, 1, 1], [], []>} : vector<8x16xbf16>, vector<16x128xbf16>, vector<8x128xf32> -> vector<8x128xf32>
    %c0_3 = arith.constant 0 : index
    %c0_4 = arith.constant 0 : index
    %3 = vector.load %arg3[%c0_3, %c0_4] : memref<1x128xf32, #tpu.memory_space<vmem>>, vector<1x128xf32>
    %4 = vector.broadcast %3 : vector<1x128xf32> to vector<8x128xf32>
    %5 = arith.addf %2, %4 : vector<8x128xf32>
    %cst_5 = arith.constant 0.000000e+00 : f32
    %6 = vector.broadcast %cst_5 : f32 to vector<8x128xf32>
    %7 = arith.maximumf %5, %6 : vector<8x128xf32>
    %8 = arith.truncf %7 : vector<8x128xf32> to vector<8x128xbf16>
    %c0_6 = arith.constant 0 : index
    %c0_7 = arith.constant 0 : index
    %9 = vector.load %arg4[%c0_6, %c0_7] : memref<128x128xbf16, #tpu.memory_space<vmem>>, vector<128x128xbf16>
    %cst_8 = arith.constant dense<0.000000e+00> : vector<8x128xf32>
    %10 = tpu.matmul %8, %9, %cst_8 {dimension_numbers = #tpu.dot_dimension_numbers<[1], [0], [0], [1], [0, 0, 1, 1], [], []>} : vector<8x128xbf16>, vector<128x128xbf16>, vector<8x128xf32> -> vector<8x128xf32>
    %c0_9 = arith.constant 0 : index
    %c0_10 = arith.constant 0 : index
    %11 = vector.load %arg5[%c0_9, %c0_10] : memref<1x128xf32, #tpu.memory_space<vmem>>, vector<1x128xf32>
    %12 = vector.broadcast %11 : vector<1x128xf32> to vector<8x128xf32>
    %13 = arith.addf %10, %12 : vector<8x128xf32>
    %c0_11 = arith.constant 0 : index
    %c0_12 = arith.constant 0 : index
    %14 = vector.load %arg8[%c0_11, %c0_12] : memref<8x128xf32, #tpu.memory_space<vmem>>, vector<8x128xf32>
    tpu.vector_store %arg8[%c0_11, %c0_12], %13 {strides = array<i32>} : memref<8x128xf32, #tpu.memory_space<vmem>>, vector<8x128xf32>,
    %cst_13 = arith.constant dense<0xFF800000> : vector<8xf32>
    %15 = vector.multi_reduction <maximumf>, %13, %cst_13 [1] : vector<8x128xf32> to vector<8xf32>
    %16 = vector.shape_cast %15 : vector<8xf32> to vector<8x1xf32>
    %17 = vector.broadcast %16 : vector<8x1xf32> to vector<8x128xf32>
    %18 = arith.subf %13, %17 : vector<8x128xf32>
    %19 = math.exp %18 : vector<8x128xf32>
    %cst_14 = arith.constant dense<0.000000e+00> : vector<8xf32>
    %20 = vector.multi_reduction <add>, %19, %cst_14 [1] : vector<8x128xf32> to vector<8xf32>
    %21 = vector.shape_cast %20 : vector<8xf32> to vector<8x1xf32>
    %cst_15 = arith.constant 1.000000e+00 : f32
    %22 = vector.broadcast %cst_15 : f32 to vector<8x1xf32>
    %23 = arith.divf %22, %21 : vector<8x1xf32>
    %24 = vector.broadcast %23 : vector<8x1xf32> to vector<8x128xf32>
    %25 = arith.mulf %19, %24 : vector<8x128xf32>
    %26 = math.log %21 : vector<8x1xf32>
    %27 = arith.addf %16, %26 : vector<8x1xf32>
    %c0_16 = arith.constant 0 : index
    %c0_17 = arith.constant 0 : index
    %28 = vector.load %arg7[%c0_16, %c0_17] : memref<8x128xf32, #tpu.memory_space<vmem>>, vector<8x128xf32>
    tpu.vector_store %arg7[%c0_16, %c0_17], %25 {strides = array<i32>} : memref<8x128xf32, #tpu.memory_space<vmem>>, vector<8x128xf32>,
    %c0_18 = arith.constant 0 : index
    %c0_19 = arith.constant 0 : index
    %29 = vector.load %arg6[%c0_18, %c0_19] : memref<8x128xf32, #tpu.memory_space<vmem>>, vector<8x128xf32>
    %30 = vector.broadcast %27 : vector<8x1xf32> to vector<8x128xf32>
    %31 = arith.subf %13, %30 : vector<8x128xf32>
    %cst_20 = arith.constant -18.420681 : f32
    %32 = vector.broadcast %cst_20 : f32 to vector<8x128xf32>
    %33 = arith.maximumf %31, %32 : vector<8x128xf32>
    %34 = arith.mulf %29, %33 : vector<8x128xf32>
    %cst_21 = arith.constant dense<0.000000e+00> : vector<8xf32>
    %35 = vector.multi_reduction <add>, %34, %cst_21 [1] : vector<8x128xf32> to vector<8xf32>
    %36 = vector.shape_cast %35 : vector<8xf32> to vector<8x1xf32>
    %cst_22 = arith.constant 0.000000e+00 : f32
    %37 = vector.broadcast %cst_22 : f32 to vector<8x1xf32>
    %38 = arith.subf %37, %36 : vector<8x1xf32>
    %c0_23 = arith.constant 0 : index
    %c0_24 = arith.constant 0 : index
    %39 = vector.load %arg9[%c0_23, %c0_24] : memref<8x1xf32, #tpu.memory_space<vmem>>, vector<8x1xf32>
    tpu.vector_store %arg9[%c0_23, %c0_24], %38 {strides = array<i32>} : memref<8x1xf32, #tpu.memory_space<vmem>>, vector<8x1xf32>,
    return
  }
  func.func @transform_0(%arg0: i32) -> (i32, i32) {
    %c0_i32 = arith.constant 0 : i32
    %c0_i32_0 = arith.constant 0 : i32
    return %arg0, %c0_i32 : i32, i32
  }
  func.func @transform_1(%arg0: i32) -> (i32, i32) {
    %c0_i32 = arith.constant 0 : i32
    %c0_i32_0 = arith.constant 0 : i32
    %c0_i32_1 = arith.constant 0 : i32
    return %c0_i32, %c0_i32_0 : i32, i32
  }
  func.func @transform_2(%arg0: i32) -> (i32, i32) {
    %c0_i32 = arith.constant 0 : i32
    %c0_i32_0 = arith.constant 0 : i32
    %c0_i32_1 = arith.constant 0 : i32
    return %c0_i32, %c0_i32_0 : i32, i32
  }
  func.func @transform_3(%arg0: i32) -> (i32, i32) {
    %c0_i32 = arith.constant 0 : i32
    %c0_i32_0 = arith.constant 0 : i32
    %c0_i32_1 = arith.constant 0 : i32
    return %c0_i32, %c0_i32_0 : i32, i32
  }
  func.func @transform_4(%arg0: i32) -> (i32, i32) {
    %c0_i32 = arith.constant 0 : i32
    %c0_i32_0 = arith.constant 0 : i32
    %c0_i32_1 = arith.constant 0 : i32
    return %c0_i32, %c0_i32_0 : i32, i32
  }
  func.func @transform_5(%arg0: i32) -> (i32, i32) {
    %c0_i32 = arith.constant 0 : i32
    %c0_i32_0 = arith.constant 0 : i32
    return %arg0, %c0_i32 : i32, i32
  }
  func.func @transform_6(%arg0: i32) -> (i32, i32) {
    %c0_i32 = arith.constant 0 : i32
    %c0_i32_0 = arith.constant 0 : i32
    return %arg0, %c0_i32 : i32, i32
  }
  func.func @transform_7(%arg0: i32) -> (i32, i32) {
    %c0_i32 = arith.constant 0 : i32
    %c0_i32_0 = arith.constant 0 : i32
    return %arg0, %c0_i32 : i32, i32
  }
  func.func @transform_8(%arg0: i32) -> (i32, i32) {
    %c0_i32 = arith.constant 0 : i32
    %c0_i32_0 = arith.constant 0 : i32
    return %arg0, %c0_i32 : i32, i32
  }
}

module attributes {stable_mosaic.version = 11 : i64} {
  func.func @_mlp1_train_kernel(%arg0: i32, %arg1: memref<8x16xbf16, #tpu.memory_space<vmem>>, %arg2: memref<16x128xbf16, #tpu.memory_space<vmem>>, %arg3: memref<1x128xf32, #tpu.memory_space<vmem>>, %arg4: memref<128x128xbf16, #tpu.memory_space<vmem>>, %arg5: memref<1x128xf32, #tpu.memory_space<vmem>>, %arg6: memref<8x128xf32, #tpu.memory_space<vmem>>, %arg7: memref<8x128xf32, #tpu.memory_space<vmem>>, %arg8: memref<8x128xf32, #tpu.memory_space<vmem>>, %arg9: memref<8x1xf32, #tpu.memory_space<vmem>>) attributes {dimension_semantics = [#tpu.dimension_semantics<parallel>], iteration_bounds = array<i64: 1>, scalar_prefetch = 0 : i64, scratch_operands = 0 : i64, tpu.core_type = #tpu.core_type<tc>, window_params = [{transform_indices = @transform_0, window_bounds = array<i64: 8, 16>}, {pipeline_mode = #tpu.pipeline_mode<synchronous>, transform_indices = @transform_1, window_bounds = array<i64: 16, 128>}, {pipeline_mode = #tpu.pipeline_mode<synchronous>, transform_indices = @transform_2, window_bounds = array<i64: 1, 128>}, {pipeline_mode = #tpu.pipeline_mode<synchronous>, transform_indices = @transform_3, window_bounds = array<i64: 128, 128>}, {pipeline_mode = #tpu.pipeline_mode<synchronous>, transform_indices = @transform_4, window_bounds = array<i64: 1, 128>}, {transform_indices = @transform_5, window_bounds = array<i64: 8, 128>}, {transform_indices = @transform_6, window_bounds = array<i64: 8, 128>}, {transform_indices = @transform_7, window_bounds = array<i64: 8, 128>}, {transform_indices = @transform_8, window_bounds = array<i64: 8, 1>}]} {
    %c0 = arith.constant 0 : index
    %c0_0 = arith.constant 0 : index
    %0 = vector.load %arg1[%c0, %c0_0] : memref<8x16xbf16, #tpu.memory_space<vmem>>, vector<8x16xbf16>
    %c0_1 = arith.constant 0 : index
    %c0_2 = arith.constant 0 : index
    %1 = vector.load %arg2[%c0_1, %c0_2] : memref<16x128xbf16, #tpu.memory_space<vmem>>, vector<16x128xbf16>
    %cst = arith.constant dense<0.000000e+00> : vector<8x128xf32>
    %2 = tpu.matmul %0, %1, %cst {dimension_numbers = #tpu.dot_dimension_numbers<[1], [0], [0], [1], [0, 0, 1, 1], [], []>} : vector<8x16xbf16>, vector<16x128xbf16>, vector<8x128xf32> -> vector<8x128xf32>
    %c0_3 = arith.constant 0 : index
    %c0_4 = arith.constant 0 : index
    %3 = vector.load %arg3[%c0_3, %c0_4] : memref<1x128xf32, #tpu.memory_space<vmem>>, vector<1x128xf32>
    %4 = vector.broadcast %3 : vector<1x128xf32> to vector<8x128xf32>
    %5 = arith.addf %2, %4 : vector<8x128xf32>
    %cst_5 = arith.constant 0.000000e+00 : f32
    %6 = vector.broadcast %cst_5 : f32 to vector<8x128xf32>
    %7 = arith.maximumf %5, %6 : vector<8x128xf32>
    %8 = arith.truncf %7 : vector<8x128xf32> to vector<8x128xbf16>
    %c0_6 = arith.constant 0 : index
    %c0_7 = arith.constant 0 : index
    %9 = vector.load %arg4[%c0_6, %c0_7] : memref<128x128xbf16, #tpu.memory_space<vmem>>, vector<128x128xbf16>
    %cst_8 = arith.constant dense<0.000000e+00> : vector<8x128xf32>
    %10 = tpu.matmul %8, %9, %cst_8 {dimension_numbers = #tpu.dot_dimension_numbers<[1], [0], [0], [1], [0, 0, 1, 1], [], []>} : vector<8x128xbf16>, vector<128x128xbf16>, vector<8x128xf32> -> vector<8x128xf32>
    %c0_9 = arith.constant 0 : index
    %c0_10 = arith.constant 0 : index
    %11 = vector.load %arg5[%c0_9, %c0_10] : memref<1x128xf32, #tpu.memory_space<vmem>>, vector<1x128xf32>
    %12 = vector.broadcast %11 : vector<1x128xf32> to vector<8x128xf32>
    %13 = arith.addf %10, %12 : vector<8x128xf32>
    %c0_11 = arith.constant 0 : index
    %c0_12 = arith.constant 0 : index
    %14 = vector.load %arg8[%c0_11, %c0_12] : memref<8x128xf32, #tpu.memory_space<vmem>>, vector<8x128xf32>
    tpu.vector_store %arg8[%c0_11, %c0_12], %13 {strides = array<i32>} : memref<8x128xf32, #tpu.memory_space<vmem>>, vector<8x128xf32>,
    %cst_13 = arith.constant dense<0xFF800000> : vector<8xf32>
    %15 = vector.multi_reduction <maximumf>, %13, %cst_13 [1] : vector<8x128xf32> to vector<8xf32>
    %16 = vector.shape_cast %15 : vector<8xf32> to vector<8x1xf32>
    %17 = vector.broadcast %16 : vector<8x1xf32> to vector<8x128xf32>
    %18 = arith.subf %13, %17 : vector<8x128xf32>
    %19 = math.exp %18 : vector<8x128xf32>
    %cst_14 = arith.constant dense<0.000000e+00> : vector<8xf32>
    %20 = vector.multi_reduction <add>, %19, %cst_14 [1] : vector<8x128xf32> to vector<8xf32>
    %21 = vector.shape_cast %20 : vector<8xf32> to vector<8x1xf32>
    %cst_15 = arith.constant 1.000000e+00 : f32
    %22 = vector.broadcast %cst_15 : f32 to vector<8x1xf32>
    %23 = arith.divf %22, %21 : vector<8x1xf32>
    %24 = vector.broadcast %23 : vector<8x1xf32> to vector<8x128xf32>
    %25 = arith.mulf %19, %24 : vector<8x128xf32>
    %26 = math.log %21 : vector<8x1xf32>
    %27 = arith.addf %16, %26 : vector<8x1xf32>
    %c0_16 = arith.constant 0 : index
    %c0_17 = arith.constant 0 : index
    %28 = vector.load %arg7[%c0_16, %c0_17] : memref<8x128xf32, #tpu.memory_space<vmem>>, vector<8x128xf32>
    tpu.vector_store %arg7[%c0_16, %c0_17], %25 {strides = array<i32>} : memref<8x128xf32, #tpu.memory_space<vmem>>, vector<8x128xf32>,
    %c0_18 = arith.constant 0 : index
    %c0_19 = arith.constant 0 : index
    %29 = vector.load %arg6[%c0_18, %c0_19] : memref<8x128xf32, #tpu.memory_space<vmem>>, vector<8x128xf32>
    %30 = vector.broadcast %27 : vector<8x1xf32> to vector<8x128xf32>
    %31 = arith.subf %13, %30 : vector<8x128xf32>
    %cst_20 = arith.constant -18.420681 : f32
    %32 = vector.broadcast %cst_20 : f32 to vector<8x128xf32>
    %33 = arith.maximumf %31, %32 : vector<8x128xf32>
    %34 = arith.mulf %29, %33 : vector<8x128xf32>
    %cst_21 = arith.constant dense<0.000000e+00> : vector<8xf32>
    %35 = vector.multi_reduction <add>, %34, %cst_21 [1] : vector<8x128xf32> to vector<8xf32>
    %36 = vector.shape_cast %35 : vector<8xf32> to vector<8x1xf32>
    %cst_22 = arith.constant 0.000000e+00 : f32
    %37 = vector.broadcast %cst_22 : f32 to vector<8x1xf32>
    %38 = arith.subf %37, %36 : vector<8x1xf32>
    %c0_23 = arith.constant 0 : index
    %c0_24 = arith.constant 0 : index
    %39 = vector.load %arg9[%c0_23, %c0_24] : memref<8x1xf32, #tpu.memory_space<vmem>>, vector<8x1xf32>
    tpu.vector_store %arg9[%c0_23, %c0_24], %38 {strides = array<i32>} : memref<8x1xf32, #tpu.memory_space<vmem>>, vector<8x1xf32>,
    return
  }
  func.func @transform_0(%arg0: i32) -> (i32, i32) {
    %c0_i32 = arith.constant 0 : i32
    %c0_i32_0 = arith.constant 0 : i32
    return %arg0, %c0_i32 : i32, i32
  }
  func.func @transform_1(%arg0: i32) -> (i32, i32) {
    %c0_i32 = arith.constant 0 : i32
    %c0_i32_0 = arith.constant 0 : i32
    %c0_i32_1 = arith.constant 0 : i32
    return %c0_i32, %c0_i32_0 : i32, i32
  }
  func.func @transform_2(%arg0: i32) -> (i32, i32) {
    %c0_i32 = arith.constant 0 : i32
    %c0_i32_0 = arith.constant 0 : i32
    %c0_i32_1 = arith.constant 0 : i32
    return %c0_i32, %c0_i32_0 : i32, i32
  }
  func.func @transform_3(%arg0: i32) -> (i32, i32) {
    %c0_i32 = arith.constant 0 : i32
    %c0_i32_0 = arith.constant 0 : i32
    %c0_i32_1 = arith.constant 0 : i32
    return %c0_i32, %c0_i32_0 : i32, i32
  }
  func.func @transform_4(%arg0: i32) -> (i32, i32) {
    %c0_i32 = arith.constant 0 : i32
    %c0_i32_0 = arith.constant 0 : i32
    %c0_i32_1 = arith.constant 0 : i32
    return %c0_i32, %c0_i32_0 : i32, i32
  }
  func.func @transform_5(%arg0: i32) -> (i32, i32) {
    %c0_i32 = arith.constant 0 : i32
    %c0_i32_0 = arith.constant 0 : i32
    return %arg0, %c0_i32 : i32, i32
  }
  func.func @transform_6(%arg0: i32) -> (i32, i32) {
    %c0_i32 = arith.constant 0 : i32
    %c0_i32_0 = arith.constant 0 : i32
    return %arg0, %c0_i32 : i32, i32
  }
  func.func @transform_7(%arg0: i32) -> (i32, i32) {
    %c0_i32 = arith.constant 0 : i32
    %c0_i32_0 = arith.constant 0 : i32
    return %arg0, %c0_i32 : i32, i32
  }
  func.func @transform_8(%arg0: i32) -> (i32, i32) {
    %c0_i32 = arith.constant 0 : i32
    %c0_i32_0 = arith.constant 0 : i32
    return %arg0, %c0_i32 : i32, i32
  }
}

</mosaic_0001>

<llo_original>
// kernel: tpu_custom_call.1
$region0: #{tpu_custom_call.1}
  #allocation0 [shape = 'u32[]', space=smem, size = 0x4, offset = 0x4, fixed_abs, tag = 'smem constant byte address 0x4 - core index']
  #allocation1 [shape = 'u32[144,128]{1,0:T(1,128)}', space=vmem, size = 0x12000, scoped, tag = 'internal scratch']
  %s0 = inlined_call_operand.hbm [shape: bf16[8,16], index: 0, kind: input, shape index: {}]
  %s1 = inlined_call_operand.hbm [shape: bf16[16,128], index: 1, kind: input, shape index: {}]
  %s2 = inlined_call_operand.vmem [shape: f32[1,128], index: 2, kind: input, shape index: {}]
  %s3 = inlined_call_operand.hbm [shape: bf16[128,128], index: 3, kind: input, shape index: {}]
  %s4 = inlined_call_operand.vmem [shape: f32[1,128], index: 4, kind: input, shape index: {}]
  %s5 = inlined_call_operand.vmem [shape: f32[8,128], index: 5, kind: input, shape index: {}]
  %s6 = inlined_call_operand.hbm [shape: f32[8,128], index: 6, kind: output, shape index: {0}]
  %s7 = inlined_call_operand.hbm [shape: f32[8,128], index: 7, kind: output, shape index: {1}]
  %s8 = inlined_call_operand.vmem [shape: f32[8,1], index: 8, kind: output, shape index: {2}]
  %9 = xla_tuple %s6, %s7, %s8
  %s10 = sld [smem:[#allocation0]]
  $region62: #{tpu_custom_call.1} parent=0
    _
  %s12 = ssub.s32 1, %s10
  %s13 = scalar_select 0, %s12, %s10
  $region1: #{tpu_custom_call.1} parent=0
    #allocation2 [shape = 'u8[2048]{0}', space=vmem, size = 0x800, scoped, tag = 'input window, operand 0, single buffered']
    #allocation3 [shape = 's32[1]{0}', space=sflag, size = 0x4, scoped, tag = 'scoped memory for tpu_custom_call.1']
    #allocation4 [shape = 's32[1]{0}', space=sflag, size = 0x4, scoped, tag = 'scoped memory for tpu_custom_call.1']
    #allocation5 [shape = 'u8[4096]{0}', space=vmem, size = 0x1000, scoped, tag = 'input window, operand 1, single buffered']
    #allocation6 [shape = 's32[1]{0}', space=sflag, size = 0x4, scoped, tag = 'scoped memory for tpu_custom_call.1']
    #allocation7 [shape = 'u8[32768]{0}', space=vmem, size = 0x8000, scoped, tag = 'input window, operand 3, single buffered']
    #allocation8 [shape = 'u8[4096]{0}', space=vmem, size = 0x1000, scoped, tag = 'output window, operand 0, single buffered']
    #allocation9 [shape = 'u8[4096]{0}', space=vmem, size = 0x1000, scoped, tag = 'output window, operand 1, single buffered']
    #allocation10 [shape = 's32[1]{0}', space=sflag, size = 0x4, scoped, tag = 'scoped memory for tpu_custom_call.1']
    %14 = vsyncpa [#allocation3], 0
    %15 = vsyncpa [#allocation6], 0
    %16 = vsyncpa [#allocation4], 0
    %17 = vsyncpa [#allocation10], 0
    // Predicated region
    $region2: #{tpu_custom_call.1} parent=1 // pred_check
      _
    $region3: #{tpu_custom_call.1} parent=1 // pred_check_branch
      %19 = sbr.rel (0) target = $region5
    $region4: #{tpu_custom_call.1} parent=1 // pred_region
      %s21 = ssub.s32 64, 64
      %22 = vsyncadd [#allocation3], %s21
      %s24 = sshll.u32 [#allocation2], 4
      %s25 = int_to_ptr.vmem [resolvable:$true] %s24
      %27 = dma.hbm_to_vmem [thread:$0]  %s0, 64, %s25, [#allocation3]
    $region5: #{tpu_custom_call.1} parent=1 // pred_fallthru
      _
    // Predicated region
    $region6: #{tpu_custom_call.1} parent=1 // pred_check
      _
    $region7: #{tpu_custom_call.1} parent=1 // pred_check_branch
      %29 = sbr.rel (0) target = $region9
    $region8: #{tpu_custom_call.1} parent=1 // pred_region
      %s31 = ssub.s32 128, 128
      %32 = vsyncadd [#allocation6], %s31
      %s33 = sshll.u32 [#allocation5], 4
      %s34 = int_to_ptr.vmem [resolvable:$true] %s33
      %39 = dma.hbm_to_vmem [thread:$0]  %s1, 128, %s34, [#allocation6], 64, 64, 4
    $region9: #{tpu_custom_call.1} parent=1 // pred_fallthru
      _
    // Predicated region
    $region10: #{tpu_custom_call.1} parent=1 // pred_check
      _
    $region11: #{tpu_custom_call.1} parent=1 // pred_check_branch
      %41 = sbr.rel (0) target = $region13
    $region12: #{tpu_custom_call.1} parent=1 // pred_region
      _
    $region13: #{tpu_custom_call.1} parent=1 // pred_fallthru
      _
    // Predicated region
    $region14: #{tpu_custom_call.1} parent=1 // pred_check
      _
    $region15: #{tpu_custom_call.1} parent=1 // pred_check_branch
      %43 = sbr.rel (0) target = $region17
    $region16: #{tpu_custom_call.1} parent=1 // pred_region
      %s45 = ssub.s32 1024, 1024
      %46 = vsyncadd [#allocation6], %s45
      %s47 = sshll.u32 [#allocation7], 4
      %s48 = int_to_ptr.vmem [resolvable:$true] %s47
      %53 = dma.hbm_to_vmem [thread:$0]  %s3, 1024, %s48, [#allocation6], 64, 64, 4
    $region17: #{tpu_custom_call.1} parent=1 // pred_fallthru
      _
    // Predicated region
    $region18: #{tpu_custom_call.1} parent=1 // pred_check
      _
    $region19: #{tpu_custom_call.1} parent=1 // pred_check_branch
      %55 = sbr.rel (0) target = $region21
    $region20: #{tpu_custom_call.1} parent=1 // pred_region
      _
    $region21: #{tpu_custom_call.1} parent=1 // pred_fallthru
      _
    // Predicated region
    $region22: #{tpu_custom_call.1} parent=1 // pred_check
      _
    $region23: #{tpu_custom_call.1} parent=1 // pred_check_branch
      %57 = sbr.rel (0) target = $region25
    $region24: #{tpu_custom_call.1} parent=1 // pred_region
      _
    $region25: #{tpu_custom_call.1} parent=1 // pred_fallthru
      _
    // Predicated region
    $region26: #{tpu_custom_call.1} parent=1 // pred_check
      _
    $region27: #{tpu_custom_call.1} parent=1 // pred_check_branch
      %59 = sbr.rel (0) target = $region29
    $region28: #{tpu_custom_call.1} parent=1 // pred_region
      %60 = dma.done [#allocation3], 64
    $region29: #{tpu_custom_call.1} parent=1 // pred_fallthru
      _
    // Predicated region
    $region30: #{tpu_custom_call.1} parent=1 // pred_check
      _
    $region31: #{tpu_custom_call.1} parent=1 // pred_check_branch
      %62 = sbr.rel (0) target = $region33
    $region32: #{tpu_custom_call.1} parent=1 // pred_region
      %63 = dma.done [#allocation6], 128
    $region33: #{tpu_custom_call.1} parent=1 // pred_fallthru
      _
    // Predicated region
    $region34: #{tpu_custom_call.1} parent=1 // pred_check
      _
    $region35: #{tpu_custom_call.1} parent=1 // pred_check_branch
      %65 = sbr.rel (0) target = $region37
    $region36: #{tpu_custom_call.1} parent=1 // pred_region
      %66 = dma.done [#allocation6], 1024
    $region37: #{tpu_custom_call.1} parent=1 // pred_fallthru
      _
    %v68 = vld [vmem:[#allocation2] sm:$0xf]
    %v69 = vld [vmem:[#allocation5] sm:$0xf]
    %v70 = vld [vmem:[#allocation5 + $0x4] sm:$0xf]
    %v71 = vld [vmem:[%s2] sm:$0x1]
    %v73 = vlaneseq
    %v74 = vshrl.u32 %v73, 7
    %v75 = vsub.s32 0, %v74
    %v76 = vrot.slane %v71, %v75
    %v80 = vunpack.c.l.b16 %v69
    %v81 = vunpack.c.l.b16 %v70
    %v82 = vpack.c.b16 %v81, %v80
    %vm84 = vcmask 130048
    %v86 = vsel %vm84, %v68, 0
    %88 = vmatprep.subr.bf16.mxu0 0
    %89 = vmatpush1.bf16.msra.mxu0 %v82
    %90 = vmatprep.subr.bf16.mxu0 0
    %91 = vmatpush1.bf16.msra.mxu0 0
    %92 = vmatprep.subr.bf16.mxu0 0
    %93 = vmatpush1.bf16.msra.mxu0 0
    %94 = vmatprep.subr.bf16.mxu0 0
    %95 = vmatpush1.bf16.msra.mxu0 0
    %96 = vmatprep.subr.bf16.mxu0 0
    %97 = vmatpush1.bf16.msra.mxu0 0
    %98 = vmatprep.subr.bf16.mxu0 0
    %99 = vmatpush1.bf16.msra.mxu0 0
    %100 = vmatprep.subr.bf16.mxu0 0
    %101 = vmatpush1.bf16.msra.mxu0 0
    %102 = vmatprep.subr.bf16.mxu0 0
    %103 = vmatpush1.bf16.msra.mxu0 0
    %104 = vmatprep.subr.bf16.mxu0 0
    %105 = vmatpush1.bf16.msra.mxu0 0
    %106 = vmatprep.subr.bf16.mxu0 0
    %107 = vmatpush1.bf16.msra.mxu0 0
    %108 = vmatprep.subr.bf16.mxu0 0
    %109 = vmatpush1.bf16.msra.mxu0 0
    %110 = vmatprep.subr.bf16.mxu0 0
    %111 = vmatpush1.bf16.msra.mxu0 0
    %112 = vmatprep.subr.bf16.mxu0 0
    %113 = vmatpush1.bf16.msra.mxu0 0
    %114 = vmatprep.subr.bf16.mxu0 0
    %115 = vmatpush1.bf16.msra.mxu0 0
    %116 = vmatprep.subr.bf16.mxu0 0
    %117 = vmatpush1.bf16.msra.mxu0 0
    %118 = vmatprep.subr.bf16.mxu0 0
    %119 = vmatpush1.bf16.msra.mxu0 0
    %120 = vmatprep.mubr.bf16.mxu0 0
    %121 = vmatmul.mubr.bf16.gmra.mrb[0].mxu0 %v86
    %v122 = vpop.f32.mrb[0].mxu0
    %v123 = vadd.f32 %v76, %v122
    %v124 = vpop.f32.mrb[0].mxu0
    %v125 = vpop.f32.mrb[0].mxu0
    %v126 = vpop.f32.mrb[0].mxu0
    %127 = vdwg.mxu0
    %v128 = vmax.f32 %v123, 0.0
    %v129 = vpack.c.bf16 %v128, %v128
    %v130 = vld [vmem:[#allocation7] sm:$0xf]
    %v131 = vld [vmem:[#allocation7 + $0x4] sm:$0xf]
    %v132 = vld [vmem:[#allocation7 + $0x8] sm:$0xf]
    %v133 = vld [vmem:[#allocation7 + $0xc] sm:$0xf]
    %v134 = vld [vmem:[#allocation7 + $0x10] sm:$0xf]
    %v135 = vld [vmem:[#allocation7 + $0x14] sm:$0xf]
    %v136 = vld [vmem:[#allocation7 + $0x18] sm:$0xf]
    %v137 = vld [vmem:[#allocation7 + $0x1c] sm:$0xf]
    %v138 = vld [vmem:[#allocation7 + $0x20] sm:$0xf]
    %v139 = vld [vmem:[#allocation7 + $0x24] sm:$0xf]
    %v140 = vld [vmem:[#allocation7 + $0x28] sm:$0xf]
    %v141 = vld [vmem:[#allocation7 + $0x2c] sm:$0xf]
    %v142 = vld [vmem:[#allocation7 + $0x30] sm:$0xf]
    %v143 = vld [vmem:[#allocation7 + $0x34] sm:$0xf]
    %v144 = vld [vmem:[#allocation7 + $0x38] sm:$0xf]
    %v145 = vld [vmem:[#allocation7 + $0x3c] sm:$0xf]
    %v146 = vld [vmem:[%s4] sm:$0x1]
    %v148 = vlaneseq
    %v149 = vshrl.u32 %v148, 7
    %v150 = vsub.s32 0, %v149
    %v151 = vrot.slane %v146, %v150
    %v169 = vunpack.c.l.b16 %v130
    %v170 = vunpack.c.l.b16 %v131
    %v171 = vunpack.c.l.b16 %v132
    %v172 = vunpack.c.l.b16 %v133
    %v173 = vunpack.c.l.b16 %v134
    %v174 = vunpack.c.l.b16 %v135
    %v175 = vunpack.c.l.b16 %v136
    %v176 = vunpack.c.l.b16 %v137
    %v177 = vunpack.c.l.b16 %v138
    %v178 = vunpack.c.l.b16 %v139
    %v179 = vunpack.c.l.b16 %v140
    %v180 = vunpack.c.l.b16 %v141
    %v181 = vunpack.c.l.b16 %v142
    %v182 = vunpack.c.l.b16 %v143
    %v183 = vunpack.c.l.b16 %v144
    %v184 = vunpack.c.l.b16 %v145
    %v185 = vpack.c.b16 %v170, %v169
    %v186 = vpack.c.b16 %v172, %v171
    %v187 = vpack.c.b16 %v174, %v173
    %v188 = vpack.c.b16 %v176, %v175
    %v189 = vpack.c.b16 %v178, %v177
    %v190 = vpack.c.b16 %v180, %v179
    %v191 = vpack.c.b16 %v182, %v181
    %v192 = vpack.c.b16 %v184, %v183
    %201 = vmatprep.subr.bf16.mxu0 0
    %202 = vmatpush1.bf16.msra.mxu0 %v185
    %203 = vmatprep.subr.bf16.mxu0 0
    %204 = vmatpush1.bf16.msra.mxu0 %v186
    %205 = vmatprep.subr.bf16.mxu0 0
    %206 = vmatpush1.bf16.msra.mxu0 %v187
    %207 = vmatprep.subr.bf16.mxu0 0
    %208 = vmatpush1.bf16.msra.mxu0 %v188
    %209 = vmatprep.subr.bf16.mxu0 0
    %210 = vmatpush1.bf16.msra.mxu0 %v189
    %211 = vmatprep.subr.bf16.mxu0 0
    %212 = vmatpush1.bf16.msra.mxu0 %v190
    %213 = vmatprep.subr.bf16.mxu0 0
    %214 = vmatpush1.bf16.msra.mxu0 %v191
    %215 = vmatprep.subr.bf16.mxu0 0
    %216 = vmatpush1.bf16.msra.mxu0 %v192
    %217 = vmatprep.subr.bf16.mxu0 0
    %218 = vmatpush1.bf16.msra.mxu0 0
    %219 = vmatprep.subr.bf16.mxu0 0
    %220 = vmatpush1.bf16.msra.mxu0 0
    %221 = vmatprep.subr.bf16.mxu0 0
    %222 = vmatpush1.bf16.msra.mxu0 0
    %223 = vmatprep.subr.bf16.mxu0 0
    %224 = vmatpush1.bf16.msra.mxu0 0
    %225 = vmatprep.subr.bf16.mxu0 0
    %226 = vmatpush1.bf16.msra.mxu0 0
    %227 = vmatprep.subr.bf16.mxu0 0
    %228 = vmatpush1.bf16.msra.mxu0 0
    %229 = vmatprep.subr.bf16.mxu0 0
    %230 = vmatpush1.bf16.msra.mxu0 0
    %231 = vmatprep.subr.bf16.mxu0 0
    %232 = vmatpush1.bf16.msra.mxu0 0
    %233 = vmatprep.mubr.bf16.mxu0 0
    %234 = vmatmul.mubr.bf16.gmra.mrb[0].mxu0 %v129
    %v235 = vpop.f32.mrb[0].mxu0
    %v236 = vadd.f32 %v151, %v235
    %v237 = vpop.f32.mrb[0].mxu0
    %v238 = vpop.f32.mrb[0].mxu0
    %v239 = vpop.f32.mrb[0].mxu0
    %240 = vdwg.mxu0
    %241 = vst [vmem:[#allocation9] sm:$0xff] %v236
    %242 = vmax.xlane.f32.xlu0 %v236
    %v243 = vpop.xlane.xlu0 %242
    %v244 = vsub.f32 %v236, %v243
    %v245 = vmul.f32 %v244, 1.442695
    %v246 = vpow.pop %v245
    %247 = vadd.xlane.f32.xlu0 %v246
    %v248 = vpop.xlane.xlu0 %247
    %v249 = vrcp.pop %v248
    %v250 = vmul.f32 1.0, %v249
    %v251 = vmul.f32 %v246, %v250
    %v252 = vlog2.pop %v248
    %v253 = vmul.f32 %v252, 0.6931472
    %v254 = vadd.f32 %v243, %v253
    %255 = vst [vmem:[#allocation8] sm:$0xff] %v251
    %v256 = vld [vmem:[%s5] sm:$0xff]
    %v257 = vsub.f32 %v236, %v254
    %v258 = vmax.f32 %v257, -18.420681
    %v259 = vmul.f32 %v256, %v258
    %260 = vadd.xlane.f32.xlu0 %v259
    %v261 = vpop.xlane.xlu0 %260
    %v262 = vsub.f32 0.0, %v261
    %vm263 = vcmask 7168
    %264 = vst.msk [vmem:[%s8] sm:$0xff] %vm263, %v262
    // Predicated region
    $region38: #{tpu_custom_call.1} parent=1 // pred_check
      _
    $region39: #{tpu_custom_call.1} parent=1 // pred_check_branch
      %266 = sbr.rel (0) target = $region41
    $region40: #{tpu_custom_call.1} parent=1 // pred_region
      %s268 = ssub.s32 128, 128
      %269 = vsyncadd [#allocation4], %s268
      %s271 = sshll.u32 [#allocation8], 4
      %s272 = int_to_ptr.vmem [resolvable:$true] %s271
      %274 = dma.vmem_to_hbm [thread:$0]  %s272, 128, %s6, [#allocation4]
    $region41: #{tpu_custom_call.1} parent=1 // pred_fallthru
      _
    // Predicated region
    $region42: #{tpu_custom_call.1} parent=1 // pred_check
      _
    $region43: #{tpu_custom_call.1} parent=1 // pred_check_branch
      %276 = sbr.rel (0) target = $region45
    $region44: #{tpu_custom_call.1} parent=1 // pred_region
      %s278 = ssub.s32 128, 128
      %279 = vsyncadd [#allocation10], %s278
      %s281 = sshll.u32 [#allocation9], 4
      %s282 = int_to_ptr.vmem [resolvable:$true] %s281
      %284 = dma.vmem_to_hbm [thread:$0]  %s282, 128, %s7, [#allocation10]
    $region45: #{tpu_custom_call.1} parent=1 // pred_fallthru
      _
    // Predicated region
    $region46: #{tpu_custom_call.1} parent=1 // pred_check
      _
    $region47: #{tpu_custom_call.1} parent=1 // pred_check_branch
      %286 = sbr.rel (0) target = $region49
    $region48: #{tpu_custom_call.1} parent=1 // pred_region
      _
    $region49: #{tpu_custom_call.1} parent=1 // pred_fallthru
      _
    // Predicated region
    $region50: #{tpu_custom_call.1} parent=1 // pred_check
      _
    $region51: #{tpu_custom_call.1} parent=1 // pred_check_branch
      %288 = sbr.rel (0) target = $region53
    $region52: #{tpu_custom_call.1} parent=1 // pred_region
      %289 = dma.done [#allocation4], 128
    $region53: #{tpu_custom_call.1} parent=1 // pred_fallthru
      _
    // Predicated region
    $region54: #{tpu_custom_call.1} parent=1 // pred_check
      _
    $region55: #{tpu_custom_call.1} parent=1 // pred_check_branch
      %291 = sbr.rel (0) target = $region57
    $region56: #{tpu_custom_call.1} parent=1 // pred_region
      %292 = dma.done [#allocation10], 128
    $region57: #{tpu_custom_call.1} parent=1 // pred_fallthru
      _
    // Predicated region
    $region58: #{tpu_custom_call.1} parent=1 // pred_check
      _
    $region59: #{tpu_custom_call.1} parent=1 // pred_check_branch
      %294 = sbr.rel (0) target = $region61
    $region60: #{tpu_custom_call.1} parent=1 // pred_region
      _
    $region61: #{tpu_custom_call.1} parent=1 // pred_fallthru
      _
    %295 = vsyncpa [#allocation3], 1
    %296 = vsyncpa [#allocation6], 1
    %297 = vsyncpa [#allocation4], 1
    %298 = vsyncpa [#allocation10], 1

// kernel: tpu_custom_call.1
$region0: #{tpu_custom_call.1}
  #allocation0 [shape = 'u32[]', space=smem, size = 0x4, offset = 0x4, fixed_abs, tag = 'smem constant byte address 0x4 - core index']
  #allocation1 [shape = 'u32[144,128]{1,0:T(1,128)}', space=vmem, size = 0x12000, scoped, tag = 'internal scratch']
  %s0 = inlined_call_operand.hbm [shape: bf16[8,16], index: 0, kind: input, shape index: {}]
  %s1 = inlined_call_operand.hbm [shape: bf16[16,128], index: 1, kind: input, shape index: {}]
  %s2 = inlined_call_operand.vmem [shape: f32[1,128], index: 2, kind: input, shape index: {}]
  %s3 = inlined_call_operand.hbm [shape: bf16[128,128], index: 3, kind: input, shape index: {}]
  %s4 = inlined_call_operand.vmem [shape: f32[1,128], index: 4, kind: input, shape index: {}]
  %s5 = inlined_call_operand.vmem [shape: f32[8,128], index: 5, kind: input, shape index: {}]
  %s6 = inlined_call_operand.hbm [shape: f32[8,128], index: 6, kind: output, shape index: {0}]
  %s7 = inlined_call_operand.hbm [shape: f32[8,128], index: 7, kind: output, shape index: {1}]
  %s8 = inlined_call_operand.vmem [shape: f32[8,1], index: 8, kind: output, shape index: {2}]
  %9 = xla_tuple %s6, %s7, %s8
  %s10 = sld [smem:[#allocation0]]
  $region62: #{tpu_custom_call.1} parent=0
    _
  %s12 = ssub.s32 1, %s10
  %s13 = scalar_select 0, %s12, %s10
  $region1: #{tpu_custom_call.1} parent=0
    #allocation2 [shape = 'u8[2048]{0}', space=vmem, size = 0x800, scoped, tag = 'input window, operand 0, single buffered']
    #allocation3 [shape = 's32[1]{0}', space=sflag, size = 0x4, scoped, tag = 'scoped memory for tpu_custom_call.1']
    #allocation4 [shape = 's32[1]{0}', space=sflag, size = 0x4, scoped, tag = 'scoped memory for tpu_custom_call.1']
    #allocation5 [shape = 'u8[4096]{0}', space=vmem, size = 0x1000, scoped, tag = 'input window, operand 1, single buffered']
    #allocation6 [shape = 's32[1]{0}', space=sflag, size = 0x4, scoped, tag = 'scoped memory for tpu_custom_call.1']
    #allocation7 [shape = 'u8[32768]{0}', space=vmem, size = 0x8000, scoped, tag = 'input window, operand 3, single buffered']
    #allocation8 [shape = 'u8[4096]{0}', space=vmem, size = 0x1000, scoped, tag = 'output window, operand 0, single buffered']
    #allocation9 [shape = 'u8[4096]{0}', space=vmem, size = 0x1000, scoped, tag = 'output window, operand 1, single buffered']
    #allocation10 [shape = 's32[1]{0}', space=sflag, size = 0x4, scoped, tag = 'scoped memory for tpu_custom_call.1']
    %14 = vsyncpa [#allocation3], 0
    %15 = vsyncpa [#allocation6], 0
    %16 = vsyncpa [#allocation4], 0
    %17 = vsyncpa [#allocation10], 0
    // Predicated region
    $region2: #{tpu_custom_call.1} parent=1 // pred_check
      _
    $region3: #{tpu_custom_call.1} parent=1 // pred_check_branch
      %19 = sbr.rel (0) target = $region5
    $region4: #{tpu_custom_call.1} parent=1 // pred_region
      %s21 = ssub.s32 64, 64
      %22 = vsyncadd [#allocation3], %s21
      %s24 = sshll.u32 [#allocation2], 4
      %s25 = int_to_ptr.vmem [resolvable:$true] %s24
      %27 = dma.hbm_to_vmem [thread:$0]  %s0, 64, %s25, [#allocation3]
    $region5: #{tpu_custom_call.1} parent=1 // pred_fallthru
      _
    // Predicated region
    $region6: #{tpu_custom_call.1} parent=1 // pred_check
      _
    $region7: #{tpu_custom_call.1} parent=1 // pred_check_branch
      %29 = sbr.rel (0) target = $region9
    $region8: #{tpu_custom_call.1} parent=1 // pred_region
      %s31 = ssub.s32 128, 128
      %32 = vsyncadd [#allocation6], %s31
      %s33 = sshll.u32 [#allocation5], 4
      %s34 = int_to_ptr.vmem [resolvable:$true] %s33
      %39 = dma.hbm_to_vmem [thread:$0]  %s1, 128, %s34, [#allocation6], 64, 64, 4
    $region9: #{tpu_custom_call.1} parent=1 // pred_fallthru
      _
    // Predicated region
    $region10: #{tpu_custom_call.1} parent=1 // pred_check
      _
    $region11: #{tpu_custom_call.1} parent=1 // pred_check_branch
      %41 = sbr.rel (0) target = $region13
    $region12: #{tpu_custom_call.1} parent=1 // pred_region
      _
    $region13: #{tpu_custom_call.1} parent=1 // pred_fallthru
      _
    // Predicated region
    $region14: #{tpu_custom_call.1} parent=1 // pred_check
      _
    $region15: #{tpu_custom_call.1} parent=1 // pred_check_branch
      %43 = sbr.rel (0) target = $region17
    $region16: #{tpu_custom_call.1} parent=1 // pred_region
      %s45 = ssub.s32 1024, 1024
      %46 = vsyncadd [#allocation6], %s45
      %s47 = sshll.u32 [#allocation7], 4
      %s48 = int_to_ptr.vmem [resolvable:$true] %s47
      %53 = dma.hbm_to_vmem [thread:$0]  %s3, 1024, %s48, [#allocation6], 64, 64, 4
    $region17: #{tpu_custom_call.1} parent=1 // pred_fallthru
      _
    // Predicated region
    $region18: #{tpu_custom_call.1} parent=1 // pred_check
      _
    $region19: #{tpu_custom_call.1} parent=1 // pred_check_branch
      %55 = sbr.rel (0) target = $region21
    $region20: #{tpu_custom_call.1} parent=1 // pred_region
      _
    $region21: #{tpu_custom_call.1} parent=1 // pred_fallthru
      _
    // Predicated region
    $region22: #{tpu_custom_call.1} parent=1 // pred_check
      _
    $region23: #{tpu_custom_call.1} parent=1 // pred_check_branch
      %57 = sbr.rel (0) target = $region25
    $region24: #{tpu_custom_call.1} parent=1 // pred_region
      _
    $region25: #{tpu_custom_call.1} parent=1 // pred_fallthru
      _
    // Predicated region
    $region26: #{tpu_custom_call.1} parent=1 // pred_check
      _
    $region27: #{tpu_custom_call.1} parent=1 // pred_check_branch
      %59 = sbr.rel (0) target = $region29
    $region28: #{tpu_custom_call.1} parent=1 // pred_region
      %60 = dma.done [#allocation3], 64
    $region29: #{tpu_custom_call.1} parent=1 // pred_fallthru
      _
    // Predicated region
    $region30: #{tpu_custom_call.1} parent=1 // pred_check
      _
    $region31: #{tpu_custom_call.1} parent=1 // pred_check_branch
      %62 = sbr.rel (0) target = $region33
    $region32: #{tpu_custom_call.1} parent=1 // pred_region
      %63 = dma.done [#allocation6], 128
    $region33: #{tpu_custom_call.1} parent=1 // pred_fallthru
      _
    // Predicated region
    $region34: #{tpu_custom_call.1} parent=1 // pred_check
      _
    $region35: #{tpu_custom_call.1} parent=1 // pred_check_branch
      %65 = sbr.rel (0) target = $region37
    $region36: #{tpu_custom_call.1} parent=1 // pred_region
      %66 = dma.done [#allocation6], 1024
    $region37: #{tpu_custom_call.1} parent=1 // pred_fallthru
      _
    %v68 = vld [vmem:[#allocation2] sm:$0xf]
    %v69 = vld [vmem:[#allocation5] sm:$0xf]
    %v70 = vld [vmem:[#allocation5 + $0x4] sm:$0xf]
    %v71 = vld [vmem:[%s2] sm:$0x1]
    %v73 = vlaneseq
    %v74 = vshrl.u32 %v73, 7
    %v75 = vsub.s32 0, %v74
    %v76 = vrot.slane %v71, %v75
    %v80 = vunpack.c.l.b16 %v69
    %v81 = vunpack.c.l.b16 %v70
    %v82 = vpack.c.b16 %v81, %v80
    %vm84 = vcmask 130048
    %v86 = vsel %vm84, %v68, 0
    %88 = vmatprep.subr.bf16.mxu0 0
    %89 = vmatpush1.bf16.msra.mxu0 %v82
    %90 = vmatprep.subr.bf16.mxu0 0
    %91 = vmatpush1.bf16.msra.mxu0 0
    %92 = vmatprep.subr.bf16.mxu0 0
    %93 = vmatpush1.bf16.msra.mxu0 0
    %94 = vmatprep.subr.bf16.mxu0 0
    %95 = vmatpush1.bf16.msra.mxu0 0
    %96 = vmatprep.subr.bf16.mxu0 0
    %97 = vmatpush1.bf16.msra.mxu0 0
    %98 = vmatprep.subr.bf16.mxu0 0
    %99 = vmatpush1.bf16.msra.mxu0 0
    %100 = vmatprep.subr.bf16.mxu0 0
    %101 = vmatpush1.bf16.msra.mxu0 0
    %102 = vmatprep.subr.bf16.mxu0 0
    %103 = vmatpush1.bf16.msra.mxu0 0
    %104 = vmatprep.subr.bf16.mxu0 0
    %105 = vmatpush1.bf16.msra.mxu0 0
    %106 = vmatprep.subr.bf16.mxu0 0
    %107 = vmatpush1.bf16.msra.mxu0 0
    %108 = vmatprep.subr.bf16.mxu0 0
    %109 = vmatpush1.bf16.msra.mxu0 0
    %110 = vmatprep.subr.bf16.mxu0 0
    %111 = vmatpush1.bf16.msra.mxu0 0
    %112 = vmatprep.subr.bf16.mxu0 0
    %113 = vmatpush1.bf16.msra.mxu0 0
    %114 = vmatprep.subr.bf16.mxu0 0
    %115 = vmatpush1.bf16.msra.mxu0 0
    %116 = vmatprep.subr.bf16.mxu0 0
    %117 = vmatpush1.bf16.msra.mxu0 0
    %118 = vmatprep.subr.bf16.mxu0 0
    %119 = vmatpush1.bf16.msra.mxu0 0
    %120 = vmatprep.mubr.bf16.mxu0 0
    %121 = vmatmul.mubr.bf16.gmra.mrb[0].mxu0 %v86
    %v122 = vpop.f32.mrb[0].mxu0
    %v123 = vadd.f32 %v76, %v122
    %v124 = vpop.f32.mrb[0].mxu0
    %v125 = vpop.f32.mrb[0].mxu0
    %v126 = vpop.f32.mrb[0].mxu0
    %127 = vdwg.mxu0
    %v128 = vmax.f32 %v123, 0.0
    %v129 = vpack.c.bf16 %v128, %v128
    %v130 = vld [vmem:[#allocation7] sm:$0xf]
    %v131 = vld [vmem:[#allocation7 + $0x4] sm:$0xf]
    %v132 = vld [vmem:[#allocation7 + $0x8] sm:$0xf]
    %v133 = vld [vmem:[#allocation7 + $0xc] sm:$0xf]
    %v134 = vld [vmem:[#allocation7 + $0x10] sm:$0xf]
    %v135 = vld [vmem:[#allocation7 + $0x14] sm:$0xf]
    %v136 = vld [vmem:[#allocation7 + $0x18] sm:$0xf]
    %v137 = vld [vmem:[#allocation7 + $0x1c] sm:$0xf]
    %v138 = vld [vmem:[#allocation7 + $0x20] sm:$0xf]
    %v139 = vld [vmem:[#allocation7 + $0x24] sm:$0xf]
    %v140 = vld [vmem:[#allocation7 + $0x28] sm:$0xf]
    %v141 = vld [vmem:[#allocation7 + $0x2c] sm:$0xf]
    %v142 = vld [vmem:[#allocation7 + $0x30] sm:$0xf]
    %v143 = vld [vmem:[#allocation7 + $0x34] sm:$0xf]
    %v144 = vld [vmem:[#allocation7 + $0x38] sm:$0xf]
    %v145 = vld [vmem:[#allocation7 + $0x3c] sm:$0xf]
    %v146 = vld [vmem:[%s4] sm:$0x1]
    %v148 = vlaneseq
    %v149 = vshrl.u32 %v148, 7
    %v150 = vsub.s32 0, %v149
    %v151 = vrot.slane %v146, %v150
    %v169 = vunpack.c.l.b16 %v130
    %v170 = vunpack.c.l.b16 %v131
    %v171 = vunpack.c.l.b16 %v132
    %v172 = vunpack.c.l.b16 %v133
    %v173 = vunpack.c.l.b16 %v134
    %v174 = vunpack.c.l.b16 %v135
    %v175 = vunpack.c.l.b16 %v136
    %v176 = vunpack.c.l.b16 %v137
    %v177 = vunpack.c.l.b16 %v138
    %v178 = vunpack.c.l.b16 %v139
    %v179 = vunpack.c.l.b16 %v140
    %v180 = vunpack.c.l.b16 %v141
    %v181 = vunpack.c.l.b16 %v142
    %v182 = vunpack.c.l.b16 %v143
    %v183 = vunpack.c.l.b16 %v144
    %v184 = vunpack.c.l.b16 %v145
    %v185 = vpack.c.b16 %v170, %v169
    %v186 = vpack.c.b16 %v172, %v171
    %v187 = vpack.c.b16 %v174, %v173
    %v188 = vpack.c.b16 %v176, %v175
    %v189 = vpack.c.b16 %v178, %v177
    %v190 = vpack.c.b16 %v180, %v179
    %v191 = vpack.c.b16 %v182, %v181
    %v192 = vpack.c.b16 %v184, %v183
    %201 = vmatprep.subr.bf16.mxu0 0
    %202 = vmatpush1.bf16.msra.mxu0 %v185
    %203 = vmatprep.subr.bf16.mxu0 0
    %204 = vmatpush1.bf16.msra.mxu0 %v186
    %205 = vmatprep.subr.bf16.mxu0 0
    %206 = vmatpush1.bf16.msra.mxu0 %v187
    %207 = vmatprep.subr.bf16.mxu0 0
    %208 = vmatpush1.bf16.msra.mxu0 %v188
    %209 = vmatprep.subr.bf16.mxu0 0
    %210 = vmatpush1.bf16.msra.mxu0 %v189
    %211 = vmatprep.subr.bf16.mxu0 0
    %212 = vmatpush1.bf16.msra.mxu0 %v190
    %213 = vmatprep.subr.bf16.mxu0 0
    %214 = vmatpush1.bf16.msra.mxu0 %v191
    %215 = vmatprep.subr.bf16.mxu0 0
    %216 = vmatpush1.bf16.msra.mxu0 %v192
    %217 = vmatprep.subr.bf16.mxu0 0
    %218 = vmatpush1.bf16.msra.mxu0 0
    %219 = vmatprep.subr.bf16.mxu0 0
    %220 = vmatpush1.bf16.msra.mxu0 0
    %221 = vmatprep.subr.bf16.mxu0 0
    %222 = vmatpush1.bf16.msra.mxu0 0
    %223 = vmatprep.subr.bf16.mxu0 0
    %224 = vmatpush1.bf16.msra.mxu0 0
    %225 = vmatprep.subr.bf16.mxu0 0
    %226 = vmatpush1.bf16.msra.mxu0 0
    %227 = vmatprep.subr.bf16.mxu0 0
    %228 = vmatpush1.bf16.msra.mxu0 0
    %229 = vmatprep.subr.bf16.mxu0 0
    %230 = vmatpush1.bf16.msra.mxu0 0
    %231 = vmatprep.subr.bf16.mxu0 0
    %232 = vmatpush1.bf16.msra.mxu0 0
    %233 = vmatprep.mubr.bf16.mxu0 0
    %234 = vmatmul.mubr.bf16.gmra.mrb[0].mxu0 %v129
    %v235 = vpop.f32.mrb[0].mxu0
    %v236 = vadd.f32 %v151, %v235
    %v237 = vpop.f32.mrb[0].mxu0
    %v238 = vpop.f32.mrb[0].mxu0
    %v239 = vpop.f32.mrb[0].mxu0
    %240 = vdwg.mxu0
    %241 = vst [vmem:[#allocation9] sm:$0xff] %v236
    %242 = vmax.xlane.f32.xlu0 %v236
    %v243 = vpop.xlane.xlu0 %242
    %v244 = vsub.f32 %v236, %v243
    %v245 = vmul.f32 %v244, 1.442695
    %v246 = vpow.pop %v245
    %247 = vadd.xlane.f32.xlu0 %v246
    %v248 = vpop.xlane.xlu0 %247
    %v249 = vrcp.pop %v248
    %v250 = vmul.f32 1.0, %v249
    %v251 = vmul.f32 %v246, %v250
    %v252 = vlog2.pop %v248
    %v253 = vmul.f32 %v252, 0.6931472
    %v254 = vadd.f32 %v243, %v253
    %255 = vst [vmem:[#allocation8] sm:$0xff] %v251
    %v256 = vld [vmem:[%s5] sm:$0xff]
    %v257 = vsub.f32 %v236, %v254
    %v258 = vmax.f32 %v257, -18.420681
    %v259 = vmul.f32 %v256, %v258
    %260 = vadd.xlane.f32.xlu0 %v259
    %v261 = vpop.xlane.xlu0 %260
    %v262 = vsub.f32 0.0, %v261
    %vm263 = vcmask 7168
    %264 = vst.msk [vmem:[%s8] sm:$0xff] %vm263, %v262
    // Predicated region
    $region38: #{tpu_custom_call.1} parent=1 // pred_check
      _
    $region39: #{tpu_custom_call.1} parent=1 // pred_check_branch
      %266 = sbr.rel (0) target = $region41
    $region40: #{tpu_custom_call.1} parent=1 // pred_region
      %s268 = ssub.s32 128, 128
      %269 = vsyncadd [#allocation4], %s268
      %s271 = sshll.u32 [#allocation8], 4
      %s272 = int_to_ptr.vmem [resolvable:$true] %s271
      %274 = dma.vmem_to_hbm [thread:$0]  %s272, 128, %s6, [#allocation4]
    $region41: #{tpu_custom_call.1} parent=1 // pred_fallthru
      _
    // Predicated region
    $region42: #{tpu_custom_call.1} parent=1 // pred_check
      _
    $region43: #{tpu_custom_call.1} parent=1 // pred_check_branch
      %276 = sbr.rel (0) target = $region45
    $region44: #{tpu_custom_call.1} parent=1 // pred_region
      %s278 = ssub.s32 128, 128
      %279 = vsyncadd [#allocation10], %s278
      %s281 = sshll.u32 [#allocation9], 4
      %s282 = int_to_ptr.vmem [resolvable:$true] %s281
      %284 = dma.vmem_to_hbm [thread:$0]  %s282, 128, %s7, [#allocation10]
    $region45: #{tpu_custom_call.1} parent=1 // pred_fallthru
      _
    // Predicated region
    $region46: #{tpu_custom_call.1} parent=1 // pred_check
      _
    $region47: #{tpu_custom_call.1} parent=1 // pred_check_branch
      %286 = sbr.rel (0) target = $region49
    $region48: #{tpu_custom_call.1} parent=1 // pred_region
      _
    $region49: #{tpu_custom_call.1} parent=1 // pred_fallthru
      _
    // Predicated region
    $region50: #{tpu_custom_call.1} parent=1 // pred_check
      _
    $region51: #{tpu_custom_call.1} parent=1 // pred_check_branch
      %288 = sbr.rel (0) target = $region53
    $region52: #{tpu_custom_call.1} parent=1 // pred_region
      %289 = dma.done [#allocation4], 128
    $region53: #{tpu_custom_call.1} parent=1 // pred_fallthru
      _
    // Predicated region
    $region54: #{tpu_custom_call.1} parent=1 // pred_check
      _
    $region55: #{tpu_custom_call.1} parent=1 // pred_check_branch
      %291 = sbr.rel (0) target = $region57
    $region56: #{tpu_custom_call.1} parent=1 // pred_region
      %292 = dma.done [#allocation10], 128
    $region57: #{tpu_custom_call.1} parent=1 // pred_fallthru
      _
    // Predicated region
    $region58: #{tpu_custom_call.1} parent=1 // pred_check
      _
    $region59: #{tpu_custom_call.1} parent=1 // pred_check_branch
      %294 = sbr.rel (0) target = $region61
    $region60: #{tpu_custom_call.1} parent=1 // pred_region
      _
    $region61: #{tpu_custom_call.1} parent=1 // pred_fallthru
      _
    %295 = vsyncpa [#allocation3], 1
    %296 = vsyncpa [#allocation6], 1
    %297 = vsyncpa [#allocation4], 1
    %298 = vsyncpa [#allocation10], 1

</llo_original>
